<compile_context>
chip_gen: v6e
topology: v6e:2x2x1
jax: 0.10.0
libtpu: 0.0.40
codegen_flags: <defaults>
</compile_context>

<pallas_src>
import functools

import jax
import jax.numpy as jnp
from jax import lax
from jax.experimental import pallas as pl
from jax.experimental.pallas import tpu as pltpu


def _frn_kernel(x_ref, p_ref, o_ref, *, inv_spatial):
    # x_ref: (bm, Sp)   p_ref: (bm, 4) = [gamma, beta, tau, |eps|]   o_ref: (bm, Sp)
    x32 = x_ref[...].astype(jnp.float32)
    # Lane padding (if any) is zero-filled, so sum * (1/true_spatial) == mean.
    nu2 = jnp.sum(x32 * x32, axis=-1, keepdims=True) * inv_spatial   # (bm, 1)
    gamma = p_ref[:, 0:1]
    beta = p_ref[:, 1:2]
    tau = p_ref[:, 2:3]
    eps_abs = p_ref[:, 3:4]
    scale = gamma * lax.rsqrt(nu2 + eps_abs)       # gamma folded into rsqrt scale
    y = x32 * scale + beta                         # one mul + one add per element
    # TODO(synk): on v6e/v7x a bf16 affine/max fast-path (reduce in f32, affine in
    # native dtype) would halve compute-temporary VMEM for 16-bit inputs.
    o_ref[...] = jnp.maximum(y, tau).astype(o_ref.dtype)


def _sublane_multiple(itemsize):
    # Native sublane pack: 8 rows for 32-bit, 16 for 16-bit, 32 for 8-bit dtypes.
    return max(8, 32 // max(int(itemsize), 1))


def _choose_block_rows(rows, spatial_pad, itemsize, sub_mult, budget_bytes=20 << 20):
    """Biggest block_rows (multiple of sub_mult) whose live VMEM footprint fits
    a ~20 MiB buffer budget: 2x double-buffered x and out tiles, the lane-padded
    (bm, 4) params tile (double-buffered), and f32 compute-temporary headroom."""
    per_row = 4 * spatial_pad * itemsize      # x tile + out tile, double-buffered
    per_row += 2 * spatial_pad * 4            # f32 intermediates headroom
    per_row += 2 * 128 * 4                    # params tile, lane-padded to 128, 2 bufs
    br = int(budget_bytes // max(per_row, 1))
    br = (br // sub_mult) * sub_mult
    br = max(br, sub_mult)
    rows_ceil = -(-rows // sub_mult) * sub_mult
    br = min(br, rows_ceil)                   # never bigger than the padded row count
    return max(br, sub_mult)


@jax.jit
def frn_forward(x, gamma, beta, tau, eps):
    """x: (N, C, *spatial); gamma/beta/tau/eps: (1, C, 1, ...) or scalar eps."""
    N, C = x.shape[0], x.shape[1]
    spatial = 1
    for d in x.shape[2:]:
        spatial *= d
    rows = N * C

    x2d = x.reshape(rows, spatial)

    # Lane-dense layout: pad spatial up to a multiple of 128 only when needed
    # so every vector load/store in the kernel is unmasked.
    spatial_pad = -(-spatial // 128) * 128
    lane_pad = spatial_pad - spatial
    if lane_pad:
        x2d = jnp.pad(x2d, ((0, 0), (0, lane_pad)))

    def per_row(p):
        # Accepts (1, C, 1, ...) or scalar / 1-element params.
        p = jnp.asarray(p, jnp.float32).reshape(-1)
        if p.size == 1:
            p = jnp.broadcast_to(p, (C,))
        return jnp.tile(p.reshape(C), (N,))   # row n*C + c matches x2d ordering

    params = jnp.stack(
        [per_row(gamma), per_row(beta), per_row(tau), jnp.abs(per_row(eps))],
        axis=-1,
    )  # (rows, 4) f32

    sub_mult = _sublane_multiple(x.dtype.itemsize)
    block_rows = _choose_block_rows(rows, spatial_pad, x.dtype.itemsize, sub_mult)
    grid_rows = pl.cdiv(rows, block_rows)

    # Prefer an even number of grid steps (>1) so v7x's two TensorCores split
    # the work evenly; costs at most one extra (tiny-overhead) step elsewhere.
    if grid_rows > 1 and grid_rows % 2 == 1:
        cand = -(-rows // (grid_rows + 1))
        cand = -(-cand // sub_mult) * sub_mult
        if cand >= sub_mult and pl.cdiv(rows, cand) % 2 == 0:
            block_rows = cand
            grid_rows = pl.cdiv(rows, cand)

    # TODO(synk): for very large spatial extents (3-D/video) where even a
    # sub_mult-row block overflows the VMEM budget, add a second "arbitrary"
    # grid axis over spatial with a (block_rows, 1) f32 scratch accumulator for
    # sum(x^2) and a finalize pass.
    row_spec = pl.BlockSpec((block_rows, spatial_pad), lambda i: (i, 0))
    par_spec = pl.BlockSpec((block_rows, 4), lambda i: (i, 0))

    kernel = functools.partial(_frn_kernel, inv_spatial=1.0 / float(spatial))

    out2d = pl.pallas_call(
        kernel,
        out_shape=jax.ShapeDtypeStruct((rows, spatial_pad), x.dtype),
        grid_spec=pltpu.PrefetchScalarGridSpec(
            num_scalar_prefetch=0,
            grid=(grid_rows,),
            in_specs=[row_spec, par_spec],
            out_specs=row_spec,
        ),
        compiler_params=pltpu.CompilerParams(
            dimension_semantics=("parallel",),
            vmem_limit_bytes=32 << 20,   # never claim all of v7x's 64 MiB physical VMEM
        ),
    )(x2d, params)

    if lane_pad:
        out2d = out2d[:, :spatial]
    return out2d.reshape(x.shape)


def make_frn_params(ndim, num_features, eps=1e-6):
    """Deterministic init matching FilterResponseNormNd.reset_parameters()."""
    shape = (1, num_features) + (1,) * (ndim - 2)
    gamma = jnp.ones(shape, jnp.float32)
    beta = jnp.zeros(shape, jnp.float32)
    tau = jnp.zeros(shape, jnp.float32)
    eps_p = jnp.ones(shape, jnp.float32) * eps
    return gamma, beta, tau, eps_p


def frn_reference(x, gamma, beta, tau, eps):
    avg_dims = tuple(range(2, x.ndim))
    nu2 = jnp.mean(x * x, axis=avg_dims, keepdims=True)
    xn = x * lax.rsqrt(nu2 + jnp.abs(eps))
    return jnp.maximum(gamma * xn + beta, tau)


if __name__ == "__main__":
    key = jax.random.PRNGKey(0)

    # Case 1: standard NCHW, 128-aligned spatial, rows divisible by 8.
    N, C, H, W = 2, 4, 16, 16
    x = jax.random.normal(key, (N, C, H, W), dtype=jnp.float32)
    gamma, beta, tau, eps = make_frn_params(ndim=4, num_features=C)
    out = jax.block_until_ready(frn_forward(x, gamma, beta, tau, eps))
    ref = frn_reference(x, gamma, beta, tau, eps)
    assert out.shape == x.shape and out.dtype == x.dtype
    assert jnp.allclose(out, ref, atol=1e-5, rtol=1e-5), "mismatch vs reference"

    # Case 2: ragged row count (N*C = 15): exercises the masked partial-block
    # writeback path (no full-array jnp.pad copy of x).
    x2 = jax.random.normal(jax.random.PRNGKey(1), (3, 5, 16, 16), dtype=jnp.float32)
    g2, b2, t2, e2 = make_frn_params(ndim=4, num_features=5)
    out2 = jax.block_until_ready(frn_forward(x2, g2, b2, t2, e2))
    assert jnp.allclose(out2, frn_reference(x2, g2, b2, t2, e2), atol=1e-5, rtol=1e-5)

    # Case 3: non-128-aligned spatial (7x7) with non-trivial random params:
    # exercises the lane-padding + sum/true_spatial path.
    k3 = jax.random.PRNGKey(2)
    x3 = jax.random.normal(k3, (2, 3, 7, 7), dtype=jnp.float32)
    kg, kb, kt, ke = jax.random.split(jax.random.PRNGKey(3), 4)
    g3 = jax.random.normal(kg, (1, 3, 1, 1), jnp.float32)
    b3 = jax.random.normal(kb, (1, 3, 1, 1), jnp.float32)
    t3 = jax.random.normal(kt, (1, 3, 1, 1), jnp.float32)
    e3 = jax.random.normal(ke, (1, 3, 1, 1), jnp.float32) * 0.01 + 1e-6
    out3 = jax.block_until_ready(frn_forward(x3, g3, b3, t3, e3))
    assert jnp.allclose(out3, frn_reference(x3, g3, b3, t3, e3), atol=1e-5, rtol=1e-5)

    print("KERNEL_OK")
</pallas_src>

<mosaic_0001>
module attributes {stable_mosaic.version = 11 : i64} {
  func.func @_frn_kernel(%arg0: i32, %arg1: memref<8x256xf32, #tpu.memory_space<vmem>>, %arg2: memref<8x4xf32, #tpu.memory_space<vmem>>, %arg3: memref<8x256xf32, #tpu.memory_space<vmem>>) attributes {dimension_semantics = [#tpu.dimension_semantics<parallel>], iteration_bounds = array<i64: 1>, scalar_prefetch = 0 : i64, scratch_operands = 0 : i64, tpu.core_type = #tpu.core_type<tc>, window_params = [{transform_indices = @transform_0, window_bounds = array<i64: 8, 256>}, {transform_indices = @transform_1, window_bounds = array<i64: 8, 4>}, {transform_indices = @transform_2, window_bounds = array<i64: 8, 256>}]} {
    %c0 = arith.constant 0 : index
    %c0_0 = arith.constant 0 : index
    %0 = vector.load %arg1[%c0, %c0_0] : memref<8x256xf32, #tpu.memory_space<vmem>>, vector<8x256xf32>
    %1 = arith.mulf %0, %0 : vector<8x256xf32>
    %cst = arith.constant dense<0.000000e+00> : vector<8xf32>
    %2 = vector.multi_reduction <add>, %1, %cst [1] : vector<8x256xf32> to vector<8xf32>
    %3 = vector.shape_cast %2 : vector<8xf32> to vector<8x1xf32>
    %cst_1 = arith.constant 3.906250e-03 : f32
    %4 = vector.broadcast %cst_1 : f32 to vector<8x1xf32>
    %5 = arith.mulf %3, %4 : vector<8x1xf32>
    %c0_2 = arith.constant 0 : index
    %c0_3 = arith.constant 0 : index
    %6 = vector.load %arg2[%c0_2, %c0_3] : memref<8x4xf32, #tpu.memory_space<vmem>>, vector<8x1xf32>
    %c0_4 = arith.constant 0 : index
    %c1 = arith.constant 1 : index
    %7 = vector.load %arg2[%c0_4, %c1] : memref<8x4xf32, #tpu.memory_space<vmem>>, vector<8x1xf32>
    %c0_5 = arith.constant 0 : index
    %c2 = arith.constant 2 : index
    %8 = vector.load %arg2[%c0_5, %c2] : memref<8x4xf32, #tpu.memory_space<vmem>>, vector<8x1xf32>
    %c0_6 = arith.constant 0 : index
    %c3 = arith.constant 3 : index
    %9 = vector.load %arg2[%c0_6, %c3] : memref<8x4xf32, #tpu.memory_space<vmem>>, vector<8x1xf32>
    %10 = arith.addf %5, %9 : vector<8x1xf32>
    %11 = math.rsqrt %10 : vector<8x1xf32>
    %12 = arith.mulf %6, %11 : vector<8x1xf32>
    %13 = vector.broadcast %12 : vector<8x1xf32> to vector<8x256xf32>
    %14 = arith.mulf %0, %13 : vector<8x256xf32>
    %15 = vector.broadcast %7 : vector<8x1xf32> to vector<8x256xf32>
    %16 = arith.addf %14, %15 : vector<8x256xf32>
    %17 = vector.broadcast %8 : vector<8x1xf32> to vector<8x256xf32>
    %18 = arith.maximumf %16, %17 : vector<8x256xf32>
    %c0_7 = arith.constant 0 : index
    %c0_8 = arith.constant 0 : index
    %19 = vector.load %arg3[%c0_7, %c0_8] : memref<8x256xf32, #tpu.memory_space<vmem>>, vector<8x256xf32>
    tpu.vector_store %arg3[%c0_7, %c0_8], %18 {strides = array<i32>} : memref<8x256xf32, #tpu.memory_space<vmem>>, vector<8x256xf32>,
    return
  }
  func.func @transform_0(%arg0: i32) -> (i32, i32) {
    %c0_i32 = arith.constant 0 : i32
    %c0_i32_0 = arith.constant 0 : i32
    return %arg0, %c0_i32 : i32, i32
  }
  func.func @transform_1(%arg0: i32) -> (i32, i32) {
    %c0_i32 = arith.constant 0 : i32
    %c0_i32_0 = arith.constant 0 : i32
    return %arg0, %c0_i32 : i32, i32
  }
  func.func @transform_2(%arg0: i32) -> (i32, i32) {
    %c0_i32 = arith.constant 0 : i32
    %c0_i32_0 = arith.constant 0 : i32
    return %arg0, %c0_i32 : i32, i32
  }
}

</mosaic_0001>

<llo_original>
// kernel: tile.2
$region0: #{tile.2}
  %s0 = inlined_call_operand.vmem [shape: f32[2,4], index: 0, kind: input, shape index: {}]
  %s1 = inlined_call_operand.vmem [shape: f32[8,1], index: 1, kind: output, shape index: {}]
  $region1: #{tile.2} parent=0
    #allocation0 [shape = 'u8[4096]{0}', space=vmem, size = 0x1000, scoped, tag = 'scoped mem for input reshape']
    %s3 = sshll.u32 1, 2
    %s4 = ssub.s32 %s3, 1
    %v5 = vld [vmem:[%s0] sm:%s4]
    %6 = vst [vmem:[#allocation0] sm:%s4] %v5
    %v7 = vld [vmem:[#allocation0] sm:$0x3]
    %vm8 = vcmask 7168
    %9 = vst.msk [vmem:[%s1] ss:$4 sm:$0x3] %vm8, %v7
    %v10 = vld [vmem:[#allocation0] sm:$0x3]
    %11 = vrot.lane.b32.xlu0 %v10, 127
    %v12 = vpop.permute.xlu0 %11
    %vm13 = vcmask 7168
    %s14 = scalar_lea.vmem %s1, 1
    %15 = vst.msk [vmem:[%s14] ss:$4 sm:$0x3] %vm13, %v12
    %v16 = vld [vmem:[#allocation0] sm:$0x3]
    %17 = vrot.lane.b32.xlu0 %v16, 126
    %v18 = vpop.permute.xlu0 %17
    %vm19 = vcmask 7168
    %s20 = scalar_lea.vmem %s1, 2
    %21 = vst.msk [vmem:[%s20] ss:$4 sm:$0x3] %vm19, %v18
    %v22 = vld [vmem:[#allocation0] sm:$0x3]
    %23 = vrot.lane.b32.xlu0 %v22, 125
    %v24 = vpop.permute.xlu0 %23
    %vm25 = vcmask 7168
    %s26 = scalar_lea.vmem %s1, 3
    %27 = vst.msk [vmem:[%s26] ss:$4 sm:$0x3] %vm25, %v24

// kernel: frn_forward.1
$region0: #{frn_forward.1}
  #allocation0 [shape = 'u32[]', space=smem, size = 0x4, offset = 0x4, fixed_abs, tag = 'smem constant byte address 0x4 - core index']
  #allocation1 [shape = 'u32[144,128]{1,0:T(1,128)}', space=vmem, size = 0x12000, scoped, tag = 'internal scratch']
  %s0 = inlined_call_operand.vmem [shape: f32[8,256], index: 0, kind: input, shape index: {}]
  %s1 = inlined_call_operand.vmem [shape: f32[8,4], index: 1, kind: input, shape index: {}]
  %s2 = inlined_call_operand.vmem [shape: f32[8,256], index: 2, kind: output, shape index: {}]
  %s3 = sld [smem:[#allocation0]]
  $region18: #{frn_forward.1} parent=0
    _
  %s5 = ssub.s32 1, %s3
  %s6 = scalar_select 0, %s5, %s3
  // Predicated region
  $region2: #{frn_forward.1} parent=0 // pred_check
    _
  $region3: #{frn_forward.1} parent=0 // pred_check_branch
    %8 = sbr.rel (0) target = $region5
  $region4: #{frn_forward.1} parent=0 // pred_region
    _
  $region5: #{frn_forward.1} parent=0 // pred_fallthru
    _
  // Predicated region
  $region6: #{frn_forward.1} parent=0 // pred_check
    _
  $region7: #{frn_forward.1} parent=0 // pred_check_branch
    %10 = sbr.rel (0) target = $region9
  $region8: #{frn_forward.1} parent=0 // pred_region
    _
  $region9: #{frn_forward.1} parent=0 // pred_fallthru
    _
  %v11 = vld [vmem:[%s0] sm:$0xff]
  %v12 = vld [vmem:[%s0 + $0x8] sm:$0xff]
  %v13 = vmul.f32 %v11, %v11
  %v14 = vmul.f32 %v12, %v12
  %v15 = vadd.f32 %v13, %v14
  %16 = vadd.xlane.f32.xlu0 %v15
  %v17 = vpop.xlane.xlu0 %16
  %v18 = vmul.f32 %v17, 0.00390625
  %v19 = vld [vmem:[%s1] sm:$0xff]
  %v20 = vadd.f32 %v18, %v19
  %v21 = vrsqrt.pop %v20
  %23 = vrot.lane.b32.xlu0 %v21, 125
  %v24 = vpop.permute.xlu0 %23
  %v26 = vmul.f32 %v19, %v24
  %28 = vset.pattern.permute.xlu0 0
  %29 = vperm.xlu0 %28, %v26
  %v30 = vpop.permute.xlu0 %29
  %v32 = vmul.f32 %v11, %v30
  %v33 = vmul.f32 %v12, %v30
  %35 = vset.pattern.permute.xlu0 1
  %36 = vperm.xlu0 %35, %v19
  %v37 = vpop.permute.xlu0 %36
  %v39 = vadd.f32 %v32, %v37
  %v40 = vadd.f32 %v33, %v37
  %41 = vset.pattern.permute.xlu0 2
  %42 = vperm.xlu0 %41, %v19
  %v43 = vpop.permute.xlu0 %42
  %v45 = vmax.f32 %v39, %v43
  %v46 = vmax.f32 %v40, %v43
  %47 = vst [vmem:[%s2] sm:$0xff] %v45
  %48 = vst [vmem:[%s2 + $0x8] sm:$0xff] %v46
  // Predicated region
  $region10: #{frn_forward.1} parent=0 // pred_check
    _
  $region11: #{frn_forward.1} parent=0 // pred_check_branch
    %50 = sbr.rel (0) target = $region13
  $region12: #{frn_forward.1} parent=0 // pred_region
    _
  $region13: #{frn_forward.1} parent=0 // pred_fallthru
    _
  // Predicated region
  $region14: #{frn_forward.1} parent=0 // pred_check
    _
  $region15: #{frn_forward.1} parent=0 // pred_check_branch
    %52 = sbr.rel (0) target = $region17
  $region16: #{frn_forward.1} parent=0 // pred_region
    _
  $region17: #{frn_forward.1} parent=0 // pred_fallthru
    _

</llo_original>
